<compile_context>
chip_gen: v6e
topology: v6e:2x2x1
jax: 0.10.0
libtpu: 0.0.40
codegen_flags: <defaults>
</compile_context>

<pallas_src>
import functools

import jax
import jax.numpy as jnp
import numpy as np
from jax import lax
from jax.experimental import pallas as pl
from jax.experimental.pallas import tpu as pltpu


# ------------------------------- kernel ---------------------------------------
def _temporal_block_kernel(xpad_ref, w1_ref, b1_ref, w2_ref, b2_ref,
                           wd_ref, bd_ref, out_ref, h1pad_ref,
                           *, L, K, dilation, pad, chunk, b_tile, has_downsample):
    """One grid step = B_TILE batch samples, full (causally padded) sequence.

    xpad_ref : (B_TILE, C_in, pad + L)   compute dtype (bf16/f32)
    w1_ref   : (K, C_out, C_in)          w2_ref: (K, C_out, C_out)
    b*_ref   : (C_out, 1) f32            wd_ref: (C_out, C_in)
    out_ref  : (B_TILE, C_out, L) f32
    h1pad_ref: (B_TILE, C_out, pad + L)  VMEM staging for conv2's causal window
    """
    c_out = w1_ref.shape[1]
    n_chunks = L // chunk

    # Zero only the small causal prefix (pad columns).  Done every step (cost is
    # negligible: pad << L) instead of @pl.when(program_id==0) so it remains
    # correct when the "parallel" grid axis is sharded across TensorCores and a
    # core never sees program_id 0.
    if pad > 0:
        h1pad_ref[:, :, :pad] = jnp.zeros((b_tile, c_out, pad), h1pad_ref.dtype)

    for b in range(b_tile):
        for c in range(n_chunks):
            cs = c * chunk

            # ---- conv1 (dilated, causal via left pad) + bias + ReLU ----------
            acc1 = jnp.zeros((c_out, chunk), jnp.float32)
            for k in range(K):
                off = k * dilation
                xw = xpad_ref[b, :, cs + off: cs + off + chunk]      # (C_in, chunk)
                acc1 = acc1 + jnp.dot(w1_ref[k], xw,
                                      preferred_element_type=jnp.float32)
            h1 = jnp.maximum(acc1 + b1_ref[...], 0.0)                # relu1; dropout1 = identity
            h1_lp = h1.astype(h1pad_ref.dtype)
            # stage only the freshly computed chunk (write-once, read K times)
            h1pad_ref[b, :, pad + cs: pad + cs + chunk] = h1_lp

            # ---- conv2 (dilated, causal) + bias + ReLU -----------------------
            acc2 = jnp.zeros((c_out, chunk), jnp.float32)
            for k in range(K):
                off = k * dilation
                if off == pad:
                    hw = h1_lp                                       # freshest chunk stays in vregs
                else:
                    hw = h1pad_ref[b, :, cs + off: cs + off + chunk]
                acc2 = acc2 + jnp.dot(w2_ref[k], hw,
                                      preferred_element_type=jnp.float32)
            h2 = jnp.maximum(acc2 + b2_ref[...], 0.0)                # relu2; dropout2 = identity

            # ---- residual branch + final ReLU --------------------------------
            x_orig = xpad_ref[b, :, pad + cs: pad + cs + chunk]      # unpadded input chunk
            if has_downsample:
                res = jnp.dot(wd_ref[...], x_orig,
                              preferred_element_type=jnp.float32) + bd_ref[...]
            else:
                res = x_orig.astype(jnp.float32)                     # C_in == C_out
            out_ref[b, :, cs: cs + chunk] = \
                jnp.maximum(h2 + res, 0.0).astype(out_ref.dtype)


# ------------------------------- tiling helpers --------------------------------
def _pick_batch_tile(n, max_tile=8):
    for t in range(min(n, max_tile), 0, -1):
        if n % t == 0:
            return t
    return 1


def _pick_chunk(L, max_chunk=512):
    """Lane-axis chunk: keep accumulators vreg-resident, prefer 128-multiples."""
    if L <= max_chunk:
        return L
    for c in range(max_chunk, 127, -1):
        if L % c == 0 and c % 128 == 0:
            return c
    for c in range(max_chunk, 63, -1):
        if L % c == 0:
            return c
    return L


# ------------------------------- wrapper ---------------------------------------
def temporal_block_forward(x, w1, b1, w2, b2, wd=None, bd=None, *,
                           kernel_size, stride, dilation, padding,
                           batch_tile=None, chunk=None,
                           compute_dtype=jnp.bfloat16):
    """x: (N, C_in, L) float32 (PyTorch NCL).  Returns (N, C_out, L) float32."""
    assert stride == 1, "TCN TemporalBlock uses stride=1"
    assert padding == (kernel_size - 1) * dilation, "causal TCN padding expected"
    N, C_in, L = x.shape
    C_out = w1.shape[0]
    K, pad = kernel_size, padding
    has_downsample = (C_in != C_out)

    if batch_tile is None:
        batch_tile = _pick_batch_tile(N)
    if chunk is None:
        chunk = _pick_chunk(L)

    # Glue: single fused cast(+causal left pad) pass over x; no transposes.
    xpad = jnp.pad(x.astype(compute_dtype), ((0, 0), (0, 0), (pad, 0)))   # (N, C_in, pad+L)
    # weights (C_out, C_in, K) -> (K, C_out, C_in) so w_ref[k] is one tap matrix
    w1_koi = jnp.transpose(w1, (2, 0, 1)).astype(compute_dtype)
    w2_koi = jnp.transpose(w2, (2, 0, 1)).astype(compute_dtype)
    if has_downsample:
        wd_oi = wd[:, :, 0].astype(compute_dtype)                         # (C_out, C_in)
        bd_col = bd[:, None].astype(jnp.float32)
    else:
        wd_oi = jnp.zeros((C_out, C_in), compute_dtype)                   # unused in kernel
        bd_col = jnp.zeros((C_out, 1), jnp.float32)
    b1_col = b1[:, None].astype(jnp.float32)
    b2_col = b2[:, None].astype(jnp.float32)

    kernel = functools.partial(_temporal_block_kernel, L=L, K=K,
                               dilation=dilation, pad=pad, chunk=chunk,
                               b_tile=batch_tile, has_downsample=has_downsample)

    out = pl.pallas_call(
        kernel,
        out_shape=jax.ShapeDtypeStruct((N, C_out, L), jnp.float32),
        grid_spec=pltpu.PrefetchScalarGridSpec(
            num_scalar_prefetch=0,
            grid=(N // batch_tile,),
            in_specs=[
                pl.BlockSpec((batch_tile, C_in, pad + L), lambda i: (i, 0, 0)),
                # weights/biases: constant-indexed -> stay VMEM-resident across steps
                pl.BlockSpec((K, C_out, C_in), lambda i: (0, 0, 0)),
                pl.BlockSpec((C_out, 1), lambda i: (0, 0)),
                pl.BlockSpec((K, C_out, C_out), lambda i: (0, 0, 0)),
                pl.BlockSpec((C_out, 1), lambda i: (0, 0)),
                pl.BlockSpec((C_out, C_in), lambda i: (0, 0)),
                pl.BlockSpec((C_out, 1), lambda i: (0, 0)),
            ],
            out_specs=pl.BlockSpec((batch_tile, C_out, L), lambda i: (i, 0, 0)),
            scratch_shapes=[pltpu.VMEM((batch_tile, C_out, pad + L), compute_dtype)],
        ),
        compiler_params=pltpu.CompilerParams(
            # batch tiles are independent -> shard across v7x's 2 TensorCores
            dimension_semantics=("parallel",)),
    )(xpad, w1_koi, b1_col, w2_koi, b2_col, wd_oi, bd_col)

    return out


# ----------------------------- pure-JAX reference -------------------------------
def _ref_forward(x, w1, b1, w2, b2, wd, bd, *, dilation, padding):
    L = x.shape[-1]

    def dconv(inp, w, b):
        y = lax.conv_general_dilated(inp, w, window_strides=(1,),
                                     padding=[(padding, padding)],
                                     rhs_dilation=(dilation,),
                                     dimension_numbers=('NCH', 'OIH', 'NCH'))
        return y[:, :, :L] + b[None, :, None]          # chomp (works for padding==0 too)

    h1 = jax.nn.relu(dconv(x, w1, b1))                  # chomp1 + relu1
    h2 = jax.nn.relu(dconv(h1, w2, b2))                 # chomp2 + relu2
    if wd is not None:
        res = jnp.einsum('ncl,oc->nol', x, wd[:, :, 0]) + bd[None, :, None]
    else:
        res = x
    return jax.nn.relu(h2 + res)


# ----------------------------- parameter init -----------------------------------
def _weight_norm_conv_init(key, out_c, in_c, k):
    # weight_norm: v ~ N(0, 0.01), g = ||v|| per out channel  =>  w_eff = g*v/||v|| = v
    kv, kb = jax.random.split(key)
    v = 0.01 * jax.random.normal(kv, (out_c, in_c, k), jnp.float32)
    norm = jnp.sqrt(jnp.sum(v * v, axis=(1, 2), keepdims=True))
    w_eff = norm * v / norm
    b = 0.01 * jax.random.normal(kb, (out_c,), jnp.float32)
    return w_eff, b


if __name__ == "__main__":
    key = jax.random.PRNGKey(0)

    # --- test 1: downsample path (C_in != C_out), bf16 matmul operands ---------
    N, C_in, C_out, L = 2, 4, 8, 16
    kernel_size, stride, dilation = 3, 1, 2
    padding = (kernel_size - 1) * dilation              # 4

    kx, k1, k2, kd, key = jax.random.split(key, 5)
    x = jax.random.normal(kx, (N, C_in, L), jnp.float32)
    w1, b1 = _weight_norm_conv_init(k1, C_out, C_in, kernel_size)
    w2, b2 = _weight_norm_conv_init(k2, C_out, C_out, kernel_size)
    kdw, kdb = jax.random.split(kd)
    wd = 0.01 * jax.random.normal(kdw, (C_out, C_in, 1), jnp.float32)
    bd = 0.01 * jax.random.normal(kdb, (C_out,), jnp.float32)

    out = temporal_block_forward(x, w1, b1, w2, b2, wd, bd,
                                 kernel_size=kernel_size, stride=stride,
                                 dilation=dilation, padding=padding,
                                 compute_dtype=jnp.bfloat16)
    out = jax.block_until_ready(out)
    ref = _ref_forward(x, w1, b1, w2, b2, wd, bd, dilation=dilation, padding=padding)
    # bf16 operands / f32 accumulation vs f32 reference -> loose tolerance
    np.testing.assert_allclose(np.asarray(out), np.asarray(ref), rtol=5e-2, atol=2e-2)

    # --- test 2: identity residual (C_in == C_out), exact f32 path -------------
    N2, C2, L2 = 2, 8, 32
    ks2, dil2 = 2, 1
    pad2 = (ks2 - 1) * dil2

    kx2, k12, k22 = jax.random.split(key, 3)
    x2 = jax.random.normal(kx2, (N2, C2, L2), jnp.float32)
    w1b, b1b = _weight_norm_conv_init(k12, C2, C2, ks2)
    w2b, b2b = _weight_norm_conv_init(k22, C2, C2, ks2)

    out2 = temporal_block_forward(x2, w1b, b1b, w2b, b2b, None, None,
                                  kernel_size=ks2, stride=1,
                                  dilation=dil2, padding=pad2,
                                  compute_dtype=jnp.float32)
    out2 = jax.block_until_ready(out2)
    ref2 = _ref_forward(x2, w1b, b1b, w2b, b2b, None, None,
                        dilation=dil2, padding=pad2)
    np.testing.assert_allclose(np.asarray(out2), np.asarray(ref2), rtol=1e-5, atol=1e-5)

    print("KERNEL_OK")
</pallas_src>

<mosaic_0001>
module attributes {stable_mosaic.version = 11 : i64} {
  func.func @_temporal_block_kernel(%arg0: i32, %arg1: memref<2x4x20xbf16, #tpu.memory_space<vmem>>, %arg2: memref<3x8x4xbf16, #tpu.memory_space<vmem>>, %arg3: memref<8x1xf32, #tpu.memory_space<vmem>>, %arg4: memref<3x8x8xbf16, #tpu.memory_space<vmem>>, %arg5: memref<8x1xf32, #tpu.memory_space<vmem>>, %arg6: memref<8x4xbf16, #tpu.memory_space<vmem>>, %arg7: memref<8x1xf32, #tpu.memory_space<vmem>>, %arg8: memref<2x8x16xf32, #tpu.memory_space<vmem>>, %arg9: memref<2x8x20xbf16, #tpu.memory_space<vmem>>) attributes {dimension_semantics = [#tpu.dimension_semantics<parallel>], iteration_bounds = array<i64: 1>, scalar_prefetch = 0 : i64, scratch_operands = 1 : i64, tpu.core_type = #tpu.core_type<tc>, window_params = [{transform_indices = @transform_0, window_bounds = array<i64: 2, 4, 20>}, {pipeline_mode = #tpu.pipeline_mode<synchronous>, transform_indices = @transform_1, window_bounds = array<i64: 3, 8, 4>}, {pipeline_mode = #tpu.pipeline_mode<synchronous>, transform_indices = @transform_2, window_bounds = array<i64: 8, 1>}, {pipeline_mode = #tpu.pipeline_mode<synchronous>, transform_indices = @transform_3, window_bounds = array<i64: 3, 8, 8>}, {pipeline_mode = #tpu.pipeline_mode<synchronous>, transform_indices = @transform_4, window_bounds = array<i64: 8, 1>}, {pipeline_mode = #tpu.pipeline_mode<synchronous>, transform_indices = @transform_5, window_bounds = array<i64: 8, 4>}, {pipeline_mode = #tpu.pipeline_mode<synchronous>, transform_indices = @transform_6, window_bounds = array<i64: 8, 1>}, {transform_indices = @transform_7, window_bounds = array<i64: 2, 8, 16>}]} {
    %cst = arith.constant 0.000000e+00 : bf16
    %0 = vector.broadcast %cst : bf16 to vector<2x8x4xbf16>
    %c0 = arith.constant 0 : index
    %c0_0 = arith.constant 0 : index
    %c0_1 = arith.constant 0 : index
    %1 = vector.load %arg9[%c0, %c0_0, %c0_1] : memref<2x8x20xbf16, #tpu.memory_space<vmem>>, vector<2x8x4xbf16>
    tpu.vector_store %arg9[%c0, %c0_0, %c0_1], %0 {strides = array<i32>} : memref<2x8x20xbf16, #tpu.memory_space<vmem>>, vector<2x8x4xbf16>,
    %cst_2 = arith.constant 0.000000e+00 : f32
    %2 = vector.broadcast %cst_2 : f32 to vector<8x16xf32>
    %c0_3 = arith.constant 0 : index
    %c0_4 = arith.constant 0 : index
    %c0_5 = arith.constant 0 : index
    %3 = vector.load %arg1[%c0_3, %c0_4, %c0_5] : memref<2x4x20xbf16, #tpu.memory_space<vmem>>, vector<1x4x16xbf16>
    %4 = vector.shape_cast %3 : vector<1x4x16xbf16> to vector<4x16xbf16>
    %c0_6 = arith.constant 0 : index
    %c0_7 = arith.constant 0 : index
    %c0_8 = arith.constant 0 : index
    %5 = vector.load %arg2[%c0_6, %c0_7, %c0_8] : memref<3x8x4xbf16, #tpu.memory_space<vmem>>, vector<1x8x4xbf16>
    %6 = vector.shape_cast %5 : vector<1x8x4xbf16> to vector<8x4xbf16>
    %cst_9 = arith.constant dense<0.000000e+00> : vector<8x16xf32>
    %7 = tpu.matmul %6, %4, %cst_9 {dimension_numbers = #tpu.dot_dimension_numbers<[1], [0], [0], [1], [0, 0, 1, 1], [], []>} : vector<8x4xbf16>, vector<4x16xbf16>, vector<8x16xf32> -> vector<8x16xf32>
    %8 = arith.addf %2, %7 : vector<8x16xf32>
    %c0_10 = arith.constant 0 : index
    %c0_11 = arith.constant 0 : index
    %c2 = arith.constant 2 : index
    %9 = vector.load %arg1[%c0_10, %c0_11, %c2] : memref<2x4x20xbf16, #tpu.memory_space<vmem>>, vector<1x4x16xbf16>
    %10 = vector.shape_cast %9 : vector<1x4x16xbf16> to vector<4x16xbf16>
    %c1 = arith.constant 1 : index
    %c0_12 = arith.constant 0 : index
    %c0_13 = arith.constant 0 : index
    %11 = vector.load %arg2[%c1, %c0_12, %c0_13] : memref<3x8x4xbf16, #tpu.memory_space<vmem>>, vector<1x8x4xbf16>
    %12 = vector.shape_cast %11 : vector<1x8x4xbf16> to vector<8x4xbf16>
    %cst_14 = arith.constant dense<0.000000e+00> : vector<8x16xf32>
    %13 = tpu.matmul %12, %10, %cst_14 {dimension_numbers = #tpu.dot_dimension_numbers<[1], [0], [0], [1], [0, 0, 1, 1], [], []>} : vector<8x4xbf16>, vector<4x16xbf16>, vector<8x16xf32> -> vector<8x16xf32>
    %14 = arith.addf %8, %13 : vector<8x16xf32>
    %c0_15 = arith.constant 0 : index
    %c0_16 = arith.constant 0 : index
    %c4 = arith.constant 4 : index
    %15 = vector.load %arg1[%c0_15, %c0_16, %c4] : memref<2x4x20xbf16, #tpu.memory_space<vmem>>, vector<1x4x16xbf16>
    %16 = vector.shape_cast %15 : vector<1x4x16xbf16> to vector<4x16xbf16>
    %c2_17 = arith.constant 2 : index
    %c0_18 = arith.constant 0 : index
    %c0_19 = arith.constant 0 : index
    %17 = vector.load %arg2[%c2_17, %c0_18, %c0_19] : memref<3x8x4xbf16, #tpu.memory_space<vmem>>, vector<1x8x4xbf16>
    %18 = vector.shape_cast %17 : vector<1x8x4xbf16> to vector<8x4xbf16>
    %cst_20 = arith.constant dense<0.000000e+00> : vector<8x16xf32>
    %19 = tpu.matmul %18, %16, %cst_20 {dimension_numbers = #tpu.dot_dimension_numbers<[1], [0], [0], [1], [0, 0, 1, 1], [], []>} : vector<8x4xbf16>, vector<4x16xbf16>, vector<8x16xf32> -> vector<8x16xf32>
    %20 = arith.addf %14, %19 : vector<8x16xf32>
    %c0_21 = arith.constant 0 : index
    %c0_22 = arith.constant 0 : index
    %21 = vector.load %arg3[%c0_21, %c0_22] : memref<8x1xf32, #tpu.memory_space<vmem>>, vector<8x1xf32>
    %22 = vector.broadcast %21 : vector<8x1xf32> to vector<8x16xf32>
    %23 = arith.addf %20, %22 : vector<8x16xf32>
    %cst_23 = arith.constant 0.000000e+00 : f32
    %24 = vector.broadcast %cst_23 : f32 to vector<8x16xf32>
    %25 = arith.maximumf %23, %24 : vector<8x16xf32>
    %26 = arith.truncf %25 : vector<8x16xf32> to vector<8x16xbf16>
    %c0_24 = arith.constant 0 : index
    %c0_25 = arith.constant 0 : index
    %c4_26 = arith.constant 4 : index
    %27 = vector.load %arg9[%c0_24, %c0_25, %c4_26] : memref<2x8x20xbf16, #tpu.memory_space<vmem>>, vector<1x8x16xbf16>
    %28 = vector.shape_cast %27 : vector<1x8x16xbf16> to vector<8x16xbf16>
    %29 = vector.shape_cast %26 : vector<8x16xbf16> to vector<1x8x16xbf16>
    tpu.vector_store %arg9[%c0_24, %c0_25, %c4_26], %29 {strides = array<i32>} : memref<2x8x20xbf16, #tpu.memory_space<vmem>>, vector<1x8x16xbf16>,
    %cst_27 = arith.constant 0.000000e+00 : f32
    %30 = vector.broadcast %cst_27 : f32 to vector<8x16xf32>
    %c0_28 = arith.constant 0 : index
    %c0_29 = arith.constant 0 : index
    %c0_30 = arith.constant 0 : index
    %31 = vector.load %arg9[%c0_28, %c0_29, %c0_30] : memref<2x8x20xbf16, #tpu.memory_space<vmem>>, vector<1x8x16xbf16>
    %32 = vector.shape_cast %31 : vector<1x8x16xbf16> to vector<8x16xbf16>
    %c0_31 = arith.constant 0 : index
    %c0_32 = arith.constant 0 : index
    %c0_33 = arith.constant 0 : index
    %33 = vector.load %arg4[%c0_31, %c0_32, %c0_33] : memref<3x8x8xbf16, #tpu.memory_space<vmem>>, vector<1x8x8xbf16>
    %34 = vector.shape_cast %33 : vector<1x8x8xbf16> to vector<8x8xbf16>
    %cst_34 = arith.constant dense<0.000000e+00> : vector<8x16xf32>
    %35 = tpu.matmul %34, %32, %cst_34 {dimension_numbers = #tpu.dot_dimension_numbers<[1], [0], [0], [1], [0, 0, 1, 1], [], []>} : vector<8x8xbf16>, vector<8x16xbf16>, vector<8x16xf32> -> vector<8x16xf32>
    %36 = arith.addf %30, %35 : vector<8x16xf32>
    %c0_35 = arith.constant 0 : index
    %c0_36 = arith.constant 0 : index
    %c2_37 = arith.constant 2 : index
    %37 = vector.load %arg9[%c0_35, %c0_36, %c2_37] : memref<2x8x20xbf16, #tpu.memory_space<vmem>>, vector<1x8x16xbf16>
    %38 = vector.shape_cast %37 : vector<1x8x16xbf16> to vector<8x16xbf16>
    %c1_38 = arith.constant 1 : index
    %c0_39 = arith.constant 0 : index
    %c0_40 = arith.constant 0 : index
    %39 = vector.load %arg4[%c1_38, %c0_39, %c0_40] : memref<3x8x8xbf16, #tpu.memory_space<vmem>>, vector<1x8x8xbf16>
    %40 = vector.shape_cast %39 : vector<1x8x8xbf16> to vector<8x8xbf16>
    %cst_41 = arith.constant dense<0.000000e+00> : vector<8x16xf32>
    %41 = tpu.matmul %40, %38, %cst_41 {dimension_numbers = #tpu.dot_dimension_numbers<[1], [0], [0], [1], [0, 0, 1, 1], [], []>} : vector<8x8xbf16>, vector<8x16xbf16>, vector<8x16xf32> -> vector<8x16xf32>
    %42 = arith.addf %36, %41 : vector<8x16xf32>
    %c2_42 = arith.constant 2 : index
    %c0_43 = arith.constant 0 : index
    %c0_44 = arith.constant 0 : index
    %43 = vector.load %arg4[%c2_42, %c0_43, %c0_44] : memref<3x8x8xbf16, #tpu.memory_space<vmem>>, vector<1x8x8xbf16>
    %44 = vector.shape_cast %43 : vector<1x8x8xbf16> to vector<8x8xbf16>
    %cst_45 = arith.constant dense<0.000000e+00> : vector<8x16xf32>
    %45 = tpu.matmul %44, %26, %cst_45 {dimension_numbers = #tpu.dot_dimension_numbers<[1], [0], [0], [1], [0, 0, 1, 1], [], []>} : vector<8x8xbf16>, vector<8x16xbf16>, vector<8x16xf32> -> vector<8x16xf32>
    %46 = arith.addf %42, %45 : vector<8x16xf32>
    %c0_46 = arith.constant 0 : index
    %c0_47 = arith.constant 0 : index
    %47 = vector.load %arg5[%c0_46, %c0_47] : memref<8x1xf32, #tpu.memory_space<vmem>>, vector<8x1xf32>
    %48 = vector.broadcast %47 : vector<8x1xf32> to vector<8x16xf32>
    %49 = arith.addf %46, %48 : vector<8x16xf32>
    %cst_48 = arith.constant 0.000000e+00 : f32
    %50 = vector.broadcast %cst_48 : f32 to vector<8x16xf32>
    %51 = arith.maximumf %49, %50 : vector<8x16xf32>
    %c0_49 = arith.constant 0 : index
    %c0_50 = arith.constant 0 : index
    %c4_51 = arith.constant 4 : index
    %52 = vector.load %arg1[%c0_49, %c0_50, %c4_51] : memref<2x4x20xbf16, #tpu.memory_space<vmem>>, vector<1x4x16xbf16>
    %53 = vector.shape_cast %52 : vector<1x4x16xbf16> to vector<4x16xbf16>
    %c0_52 = arith.constant 0 : index
    %c0_53 = arith.constant 0 : index
    %54 = vector.load %arg6[%c0_52, %c0_53] : memref<8x4xbf16, #tpu.memory_space<vmem>>, vector<8x4xbf16>
    %cst_54 = arith.constant dense<0.000000e+00> : vector<8x16xf32>
    %55 = tpu.matmul %54, %53, %cst_54 {dimension_numbers = #tpu.dot_dimension_numbers<[1], [0], [0], [1], [0, 0, 1, 1], [], []>} : vector<8x4xbf16>, vector<4x16xbf16>, vector<8x16xf32> -> vector<8x16xf32>
    %c0_55 = arith.constant 0 : index
    %c0_56 = arith.constant 0 : index
    %56 = vector.load %arg7[%c0_55, %c0_56] : memref<8x1xf32, #tpu.memory_space<vmem>>, vector<8x1xf32>
    %57 = vector.broadcast %56 : vector<8x1xf32> to vector<8x16xf32>
    %58 = arith.addf %55, %57 : vector<8x16xf32>
    %59 = arith.addf %51, %58 : vector<8x16xf32>
    %cst_57 = arith.constant 0.000000e+00 : f32
    %60 = vector.broadcast %cst_57 : f32 to vector<8x16xf32>
    %61 = arith.maximumf %59, %60 : vector<8x16xf32>
    %c0_58 = arith.constant 0 : index
    %c0_59 = arith.constant 0 : index
    %c0_60 = arith.constant 0 : index
    %62 = vector.load %arg8[%c0_58, %c0_59, %c0_60] : memref<2x8x16xf32, #tpu.memory_space<vmem>>, vector<1x8x16xf32>
    %63 = vector.shape_cast %62 : vector<1x8x16xf32> to vector<8x16xf32>
    %64 = vector.shape_cast %61 : vector<8x16xf32> to vector<1x8x16xf32>
    tpu.vector_store %arg8[%c0_58, %c0_59, %c0_60], %64 {strides = array<i32>} : memref<2x8x16xf32, #tpu.memory_space<vmem>>, vector<1x8x16xf32>,
    %cst_61 = arith.constant 0.000000e+00 : f32
    %65 = vector.broadcast %cst_61 : f32 to vector<8x16xf32>
    %c1_62 = arith.constant 1 : index
    %c0_63 = arith.constant 0 : index
    %c0_64 = arith.constant 0 : index
    %66 = vector.load %arg1[%c1_62, %c0_63, %c0_64] : memref<2x4x20xbf16, #tpu.memory_space<vmem>>, vector<1x4x16xbf16>
    %67 = vector.shape_cast %66 : vector<1x4x16xbf16> to vector<4x16xbf16>
    %c0_65 = arith.constant 0 : index
    %c0_66 = arith.constant 0 : index
    %c0_67 = arith.constant 0 : index
    %68 = vector.load %arg2[%c0_65, %c0_66, %c0_67] : memref<3x8x4xbf16, #tpu.memory_space<vmem>>, vector<1x8x4xbf16>
    %69 = vector.shape_cast %68 : vector<1x8x4xbf16> to vector<8x4xbf16>
    %cst_68 = arith.constant dense<0.000000e+00> : vector<8x16xf32>
    %70 = tpu.matmul %69, %67, %cst_68 {dimension_numbers = #tpu.dot_dimension_numbers<[1], [0], [0], [1], [0, 0, 1, 1], [], []>} : vector<8x4xbf16>, vector<4x16xbf16>, vector<8x16xf32> -> vector<8x16xf32>
    %71 = arith.addf %65, %70 : vector<8x16xf32>
    %c1_69 = arith.constant 1 : index
    %c0_70 = arith.constant 0 : index
    %c2_71 = arith.constant 2 : index
    %72 = vector.load %arg1[%c1_69, %c0_70, %c2_71] : memref<2x4x20xbf16, #tpu.memory_space<vmem>>, vector<1x4x16xbf16>
    %73 = vector.shape_cast %72 : vector<1x4x16xbf16> to vector<4x16xbf16>
    %c1_72 = arith.constant 1 : index
    %c0_73 = arith.constant 0 : index
    %c0_74 = arith.constant 0 : index
    %74 = vector.load %arg2[%c1_72, %c0_73, %c0_74] : memref<3x8x4xbf16, #tpu.memory_space<vmem>>, vector<1x8x4xbf16>
    %75 = vector.shape_cast %74 : vector<1x8x4xbf16> to vector<8x4xbf16>
    %cst_75 = arith.constant dense<0.000000e+00> : vector<8x16xf32>
    %76 = tpu.matmul %75, %73, %cst_75 {dimension_numbers = #tpu.dot_dimension_numbers<[1], [0], [0], [1], [0, 0, 1, 1], [], []>} : vector<8x4xbf16>, vector<4x16xbf16>, vector<8x16xf32> -> vector<8x16xf32>
    %77 = arith.addf %71, %76 : vector<8x16xf32>
    %c1_76 = arith.constant 1 : index
    %c0_77 = arith.constant 0 : index
    %c4_78 = arith.constant 4 : index
    %78 = vector.load %arg1[%c1_76, %c0_77, %c4_78] : memref<2x4x20xbf16, #tpu.memory_space<vmem>>, vector<1x4x16xbf16>
    %79 = vector.shape_cast %78 : vector<1x4x16xbf16> to vector<4x16xbf16>
    %c2_79 = arith.constant 2 : index
    %c0_80 = arith.constant 0 : index
    %c0_81 = arith.constant 0 : index
    %80 = vector.load %arg2[%c2_79, %c0_80, %c0_81] : memref<3x8x4xbf16, #tpu.memory_space<vmem>>, vector<1x8x4xbf16>
    %81 = vector.shape_cast %80 : vector<1x8x4xbf16> to vector<8x4xbf16>
    %cst_82 = arith.constant dense<0.000000e+00> : vector<8x16xf32>
    %82 = tpu.matmul %81, %79, %cst_82 {dimension_numbers = #tpu.dot_dimension_numbers<[1], [0], [0], [1], [0, 0, 1, 1], [], []>} : vector<8x4xbf16>, vector<4x16xbf16>, vector<8x16xf32> -> vector<8x16xf32>
    %83 = arith.addf %77, %82 : vector<8x16xf32>
    %c0_83 = arith.constant 0 : index
    %c0_84 = arith.constant 0 : index
    %84 = vector.load %arg3[%c0_83, %c0_84] : memref<8x1xf32, #tpu.memory_space<vmem>>, vector<8x1xf32>
    %85 = vector.broadcast %84 : vector<8x1xf32> to vector<8x16xf32>
    %86 = arith.addf %83, %85 : vector<8x16xf32>
    %cst_85 = arith.constant 0.000000e+00 : f32
    %87 = vector.broadcast %cst_85 : f32 to vector<8x16xf32>
    %88 = arith.maximumf %86, %87 : vector<8x16xf32>
    %89 = arith.truncf %88 : vector<8x16xf32> to vector<8x16xbf16>
    %c1_86 = arith.constant 1 : index
    %c0_87 = arith.constant 0 : index
    %c4_88 = arith.constant 4 : index
    %90 = vector.load %arg9[%c1_86, %c0_87, %c4_88] : memref<2x8x20xbf16, #tpu.memory_space<vmem>>, vector<1x8x16xbf16>
    %91 = vector.shape_cast %90 : vector<1x8x16xbf16> to vector<8x16xbf16>
    %92 = vector.shape_cast %89 : vector<8x16xbf16> to vector<1x8x16xbf16>
    tpu.vector_store %arg9[%c1_86, %c0_87, %c4_88], %92 {strides = array<i32>} : memref<2x8x20xbf16, #tpu.memory_space<vmem>>, vector<1x8x16xbf16>,
    %cst_89 = arith.constant 0.000000e+00 : f32
    %93 = vector.broadcast %cst_89 : f32 to vector<8x16xf32>
    %c1_90 = arith.constant 1 : index
    %c0_91 = arith.constant 0 : index
    %c0_92 = arith.constant 0 : index
    %94 = vector.load %arg9[%c1_90, %c0_91, %c0_92] : memref<2x8x20xbf16, #tpu.memory_space<vmem>>, vector<1x8x16xbf16>
    %95 = vector.shape_cast %94 : vector<1x8x16xbf16> to vector<8x16xbf16>
    %c0_93 = arith.constant 0 : index
    %c0_94 = arith.constant 0 : index
    %c0_95 = arith.constant 0 : index
    %96 = vector.load %arg4[%c0_93, %c0_94, %c0_95] : memref<3x8x8xbf16, #tpu.memory_space<vmem>>, vector<1x8x8xbf16>
    %97 = vector.shape_cast %96 : vector<1x8x8xbf16> to vector<8x8xbf16>
    %cst_96 = arith.constant dense<0.000000e+00> : vector<8x16xf32>
    %98 = tpu.matmul %97, %95, %cst_96 {dimension_numbers = #tpu.dot_dimension_numbers<[1], [0], [0], [1], [0, 0, 1, 1], [], []>} : vector<8x8xbf16>, vector<8x16xbf16>, vector<8x16xf32> -> vector<8x16xf32>
    %99 = arith.addf %93, %98 : vector<8x16xf32>
    %c1_97 = arith.constant 1 : index
    %c0_98 = arith.constant 0 : index
    %c2_99 = arith.constant 2 : index
    %100 = vector.load %arg9[%c1_97, %c0_98, %c2_99] : memref<2x8x20xbf16, #tpu.memory_space<vmem>>, vector<1x8x16xbf16>
    %101 = vector.shape_cast %100 : vector<1x8x16xbf16> to vector<8x16xbf16>
    %c1_100 = arith.constant 1 : index
    %c0_101 = arith.constant 0 : index
    %c0_102 = arith.constant 0 : index
    %102 = vector.load %arg4[%c1_100, %c0_101, %c0_102] : memref<3x8x8xbf16, #tpu.memory_space<vmem>>, vector<1x8x8xbf16>
    %103 = vector.shape_cast %102 : vector<1x8x8xbf16> to vector<8x8xbf16>
    %cst_103 = arith.constant dense<0.000000e+00> : vector<8x16xf32>
    %104 = tpu.matmul %103, %101, %cst_103 {dimension_numbers = #tpu.dot_dimension_numbers<[1], [0], [0], [1], [0, 0, 1, 1], [], []>} : vector<8x8xbf16>, vector<8x16xbf16>, vector<8x16xf32> -> vector<8x16xf32>
    %105 = arith.addf %99, %104 : vector<8x16xf32>
    %c2_104 = arith.constant 2 : index
    %c0_105 = arith.constant 0 : index
    %c0_106 = arith.constant 0 : index
    %106 = vector.load %arg4[%c2_104, %c0_105, %c0_106] : memref<3x8x8xbf16, #tpu.memory_space<vmem>>, vector<1x8x8xbf16>
    %107 = vector.shape_cast %106 : vector<1x8x8xbf16> to vector<8x8xbf16>
    %cst_107 = arith.constant dense<0.000000e+00> : vector<8x16xf32>
    %108 = tpu.matmul %107, %89, %cst_107 {dimension_numbers = #tpu.dot_dimension_numbers<[1], [0], [0], [1], [0, 0, 1, 1], [], []>} : vector<8x8xbf16>, vector<8x16xbf16>, vector<8x16xf32> -> vector<8x16xf32>
    %109 = arith.addf %105, %108 : vector<8x16xf32>
    %c0_108 = arith.constant 0 : index
    %c0_109 = arith.constant 0 : index
    %110 = vector.load %arg5[%c0_108, %c0_109] : memref<8x1xf32, #tpu.memory_space<vmem>>, vector<8x1xf32>
    %111 = vector.broadcast %110 : vector<8x1xf32> to vector<8x16xf32>
    %112 = arith.addf %109, %111 : vector<8x16xf32>
    %cst_110 = arith.constant 0.000000e+00 : f32
    %113 = vector.broadcast %cst_110 : f32 to vector<8x16xf32>
    %114 = arith.maximumf %112, %113 : vector<8x16xf32>
    %c1_111 = arith.constant 1 : index
    %c0_112 = arith.constant 0 : index
    %c4_113 = arith.constant 4 : index
    %115 = vector.load %arg1[%c1_111, %c0_112, %c4_113] : memref<2x4x20xbf16, #tpu.memory_space<vmem>>, vector<1x4x16xbf16>
    %116 = vector.shape_cast %115 : vector<1x4x16xbf16> to vector<4x16xbf16>
    %c0_114 = arith.constant 0 : index
    %c0_115 = arith.constant 0 : index
    %117 = vector.load %arg6[%c0_114, %c0_115] : memref<8x4xbf16, #tpu.memory_space<vmem>>, vector<8x4xbf16>
    %cst_116 = arith.constant dense<0.000000e+00> : vector<8x16xf32>
    %118 = tpu.matmul %117, %116, %cst_116 {dimension_numbers = #tpu.dot_dimension_numbers<[1], [0], [0], [1], [0, 0, 1, 1], [], []>} : vector<8x4xbf16>, vector<4x16xbf16>, vector<8x16xf32> -> vector<8x16xf32>
    %c0_117 = arith.constant 0 : index
    %c0_118 = arith.constant 0 : index
    %119 = vector.load %arg7[%c0_117, %c0_118] : memref<8x1xf32, #tpu.memory_space<vmem>>, vector<8x1xf32>
    %120 = vector.broadcast %119 : vector<8x1xf32> to vector<8x16xf32>
    %121 = arith.addf %118, %120 : vector<8x16xf32>
    %122 = arith.addf %114, %121 : vector<8x16xf32>
    %cst_119 = arith.constant 0.000000e+00 : f32
    %123 = vector.broadcast %cst_119 : f32 to vector<8x16xf32>
    %124 = arith.maximumf %122, %123 : vector<8x16xf32>
    %c1_120 = arith.constant 1 : index
    %c0_121 = arith.constant 0 : index
    %c0_122 = arith.constant 0 : index
    %125 = vector.load %arg8[%c1_120, %c0_121, %c0_122] : memref<2x8x16xf32, #tpu.memory_space<vmem>>, vector<1x8x16xf32>
    %126 = vector.shape_cast %125 : vector<1x8x16xf32> to vector<8x16xf32>
    %127 = vector.shape_cast %124 : vector<8x16xf32> to vector<1x8x16xf32>
    tpu.vector_store %arg8[%c1_120, %c0_121, %c0_122], %127 {strides = array<i32>} : memref<2x8x16xf32, #tpu.memory_space<vmem>>, vector<1x8x16xf32>,
    return
  }
  func.func @transform_0(%arg0: i32) -> (i32, i32, i32) {
    %c0_i32 = arith.constant 0 : i32
    %c0_i32_0 = arith.constant 0 : i32
    %c0_i32_1 = arith.constant 0 : i32
    return %arg0, %c0_i32, %c0_i32_0 : i32, i32, i32
  }
  func.func @transform_1(%arg0: i32) -> (i32, i32, i32) {
    %c0_i32 = arith.constant 0 : i32
    %c0_i32_0 = arith.constant 0 : i32
    %c0_i32_1 = arith.constant 0 : i32
    %c0_i32_2 = arith.constant 0 : i32
    return %c0_i32, %c0_i32_0, %c0_i32_1 : i32, i32, i32
  }
  func.func @transform_2(%arg0: i32) -> (i32, i32) {
    %c0_i32 = arith.constant 0 : i32
    %c0_i32_0 = arith.constant 0 : i32
    %c0_i32_1 = arith.constant 0 : i32
    return %c0_i32, %c0_i32_0 : i32, i32
  }
  func.func @transform_3(%arg0: i32) -> (i32, i32, i32) {
    %c0_i32 = arith.constant 0 : i32
    %c0_i32_0 = arith.constant 0 : i32
    %c0_i32_1 = arith.constant 0 : i32
    %c0_i32_2 = arith.constant 0 : i32
    return %c0_i32, %c0_i32_0, %c0_i32_1 : i32, i32, i32
  }
  func.func @transform_4(%arg0: i32) -> (i32, i32) {
    %c0_i32 = arith.constant 0 : i32
    %c0_i32_0 = arith.constant 0 : i32
    %c0_i32_1 = arith.constant 0 : i32
    return %c0_i32, %c0_i32_0 : i32, i32
  }
  func.func @transform_5(%arg0: i32) -> (i32, i32) {
    %c0_i32 = arith.constant 0 : i32
    %c0_i32_0 = arith.constant 0 : i32
    %c0_i32_1 = arith.constant 0 : i32
    return %c0_i32, %c0_i32_0 : i32, i32
  }
  func.func @transform_6(%arg0: i32) -> (i32, i32) {
    %c0_i32 = arith.constant 0 : i32
    %c0_i32_0 = arith.constant 0 : i32
    %c0_i32_1 = arith.constant 0 : i32
    return %c0_i32, %c0_i32_0 : i32, i32
  }
  func.func @transform_7(%arg0: i32) -> (i32, i32, i32) {
    %c0_i32 = arith.constant 0 : i32
    %c0_i32_0 = arith.constant 0 : i32
    %c0_i32_1 = arith.constant 0 : i32
    return %arg0, %c0_i32, %c0_i32_0 : i32, i32, i32
  }
}

</mosaic_0001>

<llo_original>
// kernel: tpu_custom_call.1
$region0: #{tpu_custom_call.1}
  #allocation0 [shape = 'u32[]', space=smem, size = 0x4, offset = 0x4, fixed_abs, tag = 'smem constant byte address 0x4 - core index']
  #allocation1 [shape = 'u32[144,128]{1,0:T(1,128)}', space=vmem, size = 0x12000, scoped, tag = 'internal scratch']
  #allocation2 [shape = 'bf16[2,8,20]{2,1,0:T(8,128)(2,1)}', space=vmem, size = 0x1000, scoped, tag = 'scratch operand']
  %s0 = inlined_call_operand.vmem [shape: bf16[2,4,20], index: 0, kind: input, shape index: {}]
  %s1 = inlined_call_operand.vmem [shape: bf16[3,8,4], index: 1, kind: input, shape index: {}]
  %s2 = inlined_call_operand.vmem [shape: f32[8,1], index: 2, kind: input, shape index: {}]
  %s3 = inlined_call_operand.vmem [shape: bf16[3,8,8], index: 3, kind: input, shape index: {}]
  %s4 = inlined_call_operand.vmem [shape: f32[8,1], index: 4, kind: input, shape index: {}]
  %s5 = inlined_call_operand.vmem [shape: bf16[8,4], index: 5, kind: input, shape index: {}]
  %s6 = inlined_call_operand.vmem [shape: f32[8,1], index: 6, kind: input, shape index: {}]
  %s7 = inlined_call_operand.hbm [shape: f32[2,8,16], index: 7, kind: output, shape index: {}]
  %s8 = sld [smem:[#allocation0]]
  $region38: #{tpu_custom_call.1} parent=0
    _
  %s10 = ssub.s32 1, %s8
  %s11 = scalar_select 0, %s10, %s8
  $region1: #{tpu_custom_call.1} parent=0
    #allocation3 [shape = 'u8[8192]{0}', space=vmem, size = 0x2000, scoped, tag = 'output window, operand 0, single buffered']
    #allocation4 [shape = 's32[1]{0}', space=sflag, size = 0x4, scoped, tag = 'scoped memory for tpu_custom_call.1']
    %12 = vsyncpa [#allocation4], 0
    // Predicated region
    $region2: #{tpu_custom_call.1} parent=1 // pred_check
      _
    $region3: #{tpu_custom_call.1} parent=1 // pred_check_branch
      %14 = sbr.rel (0) target = $region5
    $region4: #{tpu_custom_call.1} parent=1 // pred_region
      _
    $region5: #{tpu_custom_call.1} parent=1 // pred_fallthru
      _
    // Predicated region
    $region6: #{tpu_custom_call.1} parent=1 // pred_check
      _
    $region7: #{tpu_custom_call.1} parent=1 // pred_check_branch
      %16 = sbr.rel (0) target = $region9
    $region8: #{tpu_custom_call.1} parent=1 // pred_region
      _
    $region9: #{tpu_custom_call.1} parent=1 // pred_fallthru
      _
    // Predicated region
    $region10: #{tpu_custom_call.1} parent=1 // pred_check
      _
    $region11: #{tpu_custom_call.1} parent=1 // pred_check_branch
      %18 = sbr.rel (0) target = $region13
    $region12: #{tpu_custom_call.1} parent=1 // pred_region
      _
    $region13: #{tpu_custom_call.1} parent=1 // pred_fallthru
      _
    // Predicated region
    $region14: #{tpu_custom_call.1} parent=1 // pred_check
      _
    $region15: #{tpu_custom_call.1} parent=1 // pred_check_branch
      %20 = sbr.rel (0) target = $region17
    $region16: #{tpu_custom_call.1} parent=1 // pred_region
      _
    $region17: #{tpu_custom_call.1} parent=1 // pred_fallthru
      _
    // Predicated region
    $region18: #{tpu_custom_call.1} parent=1 // pred_check
      _
    $region19: #{tpu_custom_call.1} parent=1 // pred_check_branch
      %22 = sbr.rel (0) target = $region21
    $region20: #{tpu_custom_call.1} parent=1 // pred_region
      _
    $region21: #{tpu_custom_call.1} parent=1 // pred_fallthru
      _
    // Predicated region
    $region22: #{tpu_custom_call.1} parent=1 // pred_check
      _
    $region23: #{tpu_custom_call.1} parent=1 // pred_check_branch
      %24 = sbr.rel (0) target = $region25
    $region24: #{tpu_custom_call.1} parent=1 // pred_region
      _
    $region25: #{tpu_custom_call.1} parent=1 // pred_fallthru
      _
    // Predicated region
    $region26: #{tpu_custom_call.1} parent=1 // pred_check
      _
    $region27: #{tpu_custom_call.1} parent=1 // pred_check_branch
      %26 = sbr.rel (0) target = $region29
    $region28: #{tpu_custom_call.1} parent=1 // pred_region
      _
    $region29: #{tpu_custom_call.1} parent=1 // pred_fallthru
      _
    %vm28 = vcmask 27648
    %29 = vst.msk [vmem:[#allocation2] sm:$0xf] %vm28, 0
    %30 = vst.msk [vmem:[#allocation2 + $0x4] sm:$0xf] %vm28, 0
    %v31 = vld [vmem:[%s0] sm:$0x3]
    %v32 = vld [vmem:[%s1] sm:$0xf]
    %s33 = scalar_lea.vmem %s1, 4
    %v34 = vld [vmem:[%s33] sm:$0xf]
    %v37 = vunpack.c.l.s4 1983009808
    %v38 = vunpack.c.0.s8 %v37
    %v39 = vlaneseq
    %v40 = vshrl.u32 %v39, 7
    %v41 = vsub.s32 %v38, %v40
    %v42 = vrot.slane %v31, %v41
    %43 = vrot.lane.b32.xlu0 %v42, 126
    %v44 = vpop.permute.xlu0 %43
    %vm45 = vcmask 31744
    %v47 = vsel %vm45, %v34, 0
    %vm49 = vcmask 1041408
    %v51 = vsel %vm49, %v44, 0
    %53 = vmatprep.subr.bf16.mxu0 0
    %54 = vmatpush1.bf16.msra.mxu0 0
    %55 = vmatprep.subr.bf16.mxu0 0
    %56 = vmatpush1.bf16.msra.mxu0 0
    %57 = vmatprep.subr.bf16.mxu0 0
    %58 = vmatpush1.bf16.msra.mxu0 0
    %59 = vmatprep.subr.bf16.mxu0 0
    %60 = vmatpush1.bf16.msra.mxu0 0
    %61 = vmatprep.subr.bf16.mxu0 0
    %62 = vmatpush1.bf16.msra.mxu0 0
    %63 = vmatprep.subr.bf16.mxu0 0
    %64 = vmatpush1.bf16.msra.mxu0 0
    %65 = vmatprep.subr.bf16.mxu0 0
    %66 = vmatpush1.bf16.msra.mxu0 0
    %67 = vmatprep.subr.bf16.mxu0 0
    %68 = vmatpush1.bf16.msra.mxu0 %v51
    %69 = vmatprep.subr.bf16.mxu0 0
    %70 = vmatpush2.bf16.msra.mxu0 0
    %71 = vmatprep.subr.bf16.mxu0 0
    %72 = vmatpush2.bf16.msra.mxu0 0
    %73 = vmatprep.subr.bf16.mxu0 0
    %74 = vmatpush2.bf16.msra.mxu0 0
    %75 = vmatprep.subr.bf16.mxu0 0
    %76 = vmatpush2.bf16.msra.mxu0 0
    %77 = vmatprep.subr.bf16.mxu0 0
    %78 = vmatpush2.bf16.msra.mxu0 0
    %79 = vmatprep.subr.bf16.mxu0 0
    %80 = vmatpush2.bf16.msra.mxu0 0
    %81 = vmatprep.subr.bf16.mxu0 0
    %82 = vmatpush2.bf16.msra.mxu0 0
    %83 = vmatprep.subr.bf16.mxu0 0
    %84 = vmatpush2.bf16.msra.mxu0 0
    %85 = vmatprep.mubr.bf16.mxu0 0
    %86 = vmatmul.mubr.bf16.gmra.mxu0 %v47
    %v87 = vpop.f32.mrf.mxu0
    %v88 = vadd.f32 0.0, %v87
    %v89 = vpop.f32.mrf.mxu0
    %v90 = vpop.f32.mrf.mxu0
    %v91 = vpop.f32.mrf.mxu0
    %92 = vdwg.mxu0
    %v94 = vsel %vm45, %v32, 0
    %v97 = vsel %vm49, %v31, 0
    %99 = vmatprep.subr.bf16.mxu0 0
    %100 = vmatpush1.bf16.msra.mxu0 0
    %101 = vmatprep.subr.bf16.mxu0 0
    %102 = vmatpush1.bf16.msra.mxu0 0
    %103 = vmatprep.subr.bf16.mxu0 0
    %104 = vmatpush1.bf16.msra.mxu0 0
    %105 = vmatprep.subr.bf16.mxu0 0
    %106 = vmatpush1.bf16.msra.mxu0 0
    %107 = vmatprep.subr.bf16.mxu0 0
    %108 = vmatpush1.bf16.msra.mxu0 0
    %109 = vmatprep.subr.bf16.mxu0 0
    %110 = vmatpush1.bf16.msra.mxu0 0
    %111 = vmatprep.subr.bf16.mxu0 0
    %112 = vmatpush1.bf16.msra.mxu0 0
    %113 = vmatprep.subr.bf16.mxu0 0
    %114 = vmatpush1.bf16.msra.mxu0 %v97
    %115 = vmatprep.subr.bf16.mxu0 0
    %116 = vmatpush2.bf16.msra.mxu0 0
    %117 = vmatprep.subr.bf16.mxu0 0
    %118 = vmatpush2.bf16.msra.mxu0 0
    %119 = vmatprep.subr.bf16.mxu0 0
    %120 = vmatpush2.bf16.msra.mxu0 0
    %121 = vmatprep.subr.bf16.mxu0 0
    %122 = vmatpush2.bf16.msra.mxu0 0
    %123 = vmatprep.subr.bf16.mxu0 0
    %124 = vmatpush2.bf16.msra.mxu0 0
    %125 = vmatprep.subr.bf16.mxu0 0
    %126 = vmatpush2.bf16.msra.mxu0 0
    %127 = vmatprep.subr.bf16.mxu0 0
    %128 = vmatpush2.bf16.msra.mxu0 0
    %129 = vmatprep.subr.bf16.mxu0 0
    %130 = vmatpush2.bf16.msra.mxu0 0
    %131 = vmatprep.mubr.bf16.mxu0 0
    %132 = vmatmul.mubr.bf16.gmra.mxu0 %v94
    %v133 = vpop.f32.mrf.mxu0
    %v134 = vadd.f32 %v88, %v133
    %v135 = vpop.f32.mrf.mxu0
    %v136 = vpop.f32.mrf.mxu0
    %v137 = vpop.f32.mrf.mxu0
    %138 = vdwg.mxu0
    %v139 = vld [vmem:[%s0] sm:$0x3]
    %s140 = scalar_lea.vmem %s1, 8
    %v141 = vld [vmem:[%s140] sm:$0xf]
    %v144 = vunpack.c.l.s4 1983009808
    %v145 = vunpack.c.0.s8 %v144
    %v146 = vlaneseq
    %v147 = vshrl.u32 %v146, 7
    %v148 = vsub.s32 %v145, %v147
    %v149 = vrot.slane %v139, %v148
    %150 = vrot.lane.b32.xlu0 %v149, 124
    %v151 = vpop.permute.xlu0 %150
    %v153 = vsel %vm45, %v141, 0
    %v156 = vsel %vm49, %v151, 0
    %158 = vmatprep.subr.bf16.mxu0 0
    %159 = vmatpush1.bf16.msra.mxu0 0
    %160 = vmatprep.subr.bf16.mxu0 0
    %161 = vmatpush1.bf16.msra.mxu0 0
    %162 = vmatprep.subr.bf16.mxu0 0
    %163 = vmatpush1.bf16.msra.mxu0 0
    %164 = vmatprep.subr.bf16.mxu0 0
    %165 = vmatpush1.bf16.msra.mxu0 0
    %166 = vmatprep.subr.bf16.mxu0 0
    %167 = vmatpush1.bf16.msra.mxu0 0
    %168 = vmatprep.subr.bf16.mxu0 0
    %169 = vmatpush1.bf16.msra.mxu0 0
    %170 = vmatprep.subr.bf16.mxu0 0
    %171 = vmatpush1.bf16.msra.mxu0 0
    %172 = vmatprep.subr.bf16.mxu0 0
    %173 = vmatpush1.bf16.msra.mxu0 %v156
    %174 = vmatprep.subr.bf16.mxu0 0
    %175 = vmatpush2.bf16.msra.mxu0 0
    %176 = vmatprep.subr.bf16.mxu0 0
    %177 = vmatpush2.bf16.msra.mxu0 0
    %178 = vmatprep.subr.bf16.mxu0 0
    %179 = vmatpush2.bf16.msra.mxu0 0
    %180 = vmatprep.subr.bf16.mxu0 0
    %181 = vmatpush2.bf16.msra.mxu0 0
    %182 = vmatprep.subr.bf16.mxu0 0
    %183 = vmatpush2.bf16.msra.mxu0 0
    %184 = vmatprep.subr.bf16.mxu0 0
    %185 = vmatpush2.bf16.msra.mxu0 0
    %186 = vmatprep.subr.bf16.mxu0 0
    %187 = vmatpush2.bf16.msra.mxu0 0
    %188 = vmatprep.subr.bf16.mxu0 0
    %189 = vmatpush2.bf16.msra.mxu0 0
    %190 = vmatprep.mubr.bf16.mxu0 0
    %191 = vmatmul.mubr.bf16.gmra.mxu0 %v153
    %v192 = vpop.f32.mrf.mxu0
    %v193 = vadd.f32 0.0, %v192
    %v194 = vpop.f32.mrf.mxu0
    %v195 = vpop.f32.mrf.mxu0
    %v196 = vpop.f32.mrf.mxu0
    %197 = vdwg.mxu0
    %v198 = vadd.f32 %v134, %v193
    %v199 = vld [vmem:[%s2] sm:$0xff]
    %201 = vset.pattern.permute.xlu0 0
    %202 = vperm.xlu0 %201, %v199
    %v203 = vpop.permute.xlu0 %202
    %v205 = vadd.f32 %v198, %v203
    %v206 = vmax.f32 %v205, 0.0
    %v207 = vpack.c.bf16 %v206, %v206
    %v209 = vunpack.c.l.b16 %v207
    %v210 = vpack.c.b16 %v209, %v209
    %211 = vrot.lane.b32.xlu0 %v210, 4
    %v212 = vpop.permute.xlu0 %211
    %vm214 = vcmask 158752
    %215 = vst.msk [vmem:[#allocation2] sm:$0xf] %vm214, %v212
    %v216 = vld [vmem:[#allocation2] sm:$0xf]
    %v217 = vld [vmem:[%s3] sm:$0xf]
    %s218 = scalar_lea.vmem %s3, 4
    %v219 = vld [vmem:[%s218] sm:$0xf]
    %v221 = vunpack.c.l.b16 %v216
    %v222 = vpack.c.b16 %v221, %v221
    %223 = vrot.lane.b32.xlu0 %v222, 126
    %v224 = vpop.permute.xlu0 %223
    %vm225 = vcmask 64512
    %v227 = vsel %vm225, %v219, 0
    %vm229 = vcmask 1043456
    %v231 = vsel %vm229, %v224, 0
    %233 = vmatprep.subr.bf16.mxu0 0
    %234 = vmatpush1.bf16.msra.mxu0 0
    %235 = vmatprep.subr.bf16.mxu0 0
    %236 = vmatpush1.bf16.msra.mxu0 0
    %237 = vmatprep.subr.bf16.mxu0 0
    %238 = vmatpush1.bf16.msra.mxu0 0
    %239 = vmatprep.subr.bf16.mxu0 0
    %240 = vmatpush1.bf16.msra.mxu0 0
    %241 = vmatprep.subr.bf16.mxu0 0
    %242 = vmatpush1.bf16.msra.mxu0 0
    %243 = vmatprep.subr.bf16.mxu0 0
    %244 = vmatpush1.bf16.msra.mxu0 0
    %245 = vmatprep.subr.bf16.mxu0 0
    %246 = vmatpush1.bf16.msra.mxu0 0
    %247 = vmatprep.subr.bf16.mxu0 0
    %248 = vmatpush1.bf16.msra.mxu0 %v231
    %249 = vmatprep.subr.bf16.mxu0 0
    %250 = vmatpush2.bf16.msra.mxu0 0
    %251 = vmatprep.subr.bf16.mxu0 0
    %252 = vmatpush2.bf16.msra.mxu0 0
    %253 = vmatprep.subr.bf16.mxu0 0
    %254 = vmatpush2.bf16.msra.mxu0 0
    %255 = vmatprep.subr.bf16.mxu0 0
    %256 = vmatpush2.bf16.msra.mxu0 0
    %257 = vmatprep.subr.bf16.mxu0 0
    %258 = vmatpush2.bf16.msra.mxu0 0
    %259 = vmatprep.subr.bf16.mxu0 0
    %260 = vmatpush2.bf16.msra.mxu0 0
    %261 = vmatprep.subr.bf16.mxu0 0
    %262 = vmatpush2.bf16.msra.mxu0 0
    %263 = vmatprep.subr.bf16.mxu0 0
    %264 = vmatpush2.bf16.msra.mxu0 0
    %265 = vmatprep.mubr.bf16.mxu0 0
    %266 = vmatmul.mubr.bf16.gmra.mxu0 %v227
    %v267 = vpop.f32.mrf.mxu0
    %v268 = vadd.f32 0.0, %v267
    %v269 = vpop.f32.mrf.mxu0
    %v270 = vpop.f32.mrf.mxu0
    %v271 = vpop.f32.mrf.mxu0
    %272 = vdwg.mxu0
    %v274 = vsel %vm225, %v217, 0
    %v277 = vsel %vm229, %v216, 0
    %279 = vmatprep.subr.bf16.mxu0 0
    %280 = vmatpush1.bf16.msra.mxu0 0
    %281 = vmatprep.subr.bf16.mxu0 0
    %282 = vmatpush1.bf16.msra.mxu0 0
    %283 = vmatprep.subr.bf16.mxu0 0
    %284 = vmatpush1.bf16.msra.mxu0 0
    %285 = vmatprep.subr.bf16.mxu0 0
    %286 = vmatpush1.bf16.msra.mxu0 0
    %287 = vmatprep.subr.bf16.mxu0 0
    %288 = vmatpush1.bf16.msra.mxu0 0
    %289 = vmatprep.subr.bf16.mxu0 0
    %290 = vmatpush1.bf16.msra.mxu0 0
    %291 = vmatprep.subr.bf16.mxu0 0
    %292 = vmatpush1.bf16.msra.mxu0 0
    %293 = vmatprep.subr.bf16.mxu0 0
    %294 = vmatpush1.bf16.msra.mxu0 %v277
    %295 = vmatprep.subr.bf16.mxu0 0
    %296 = vmatpush2.bf16.msra.mxu0 0
    %297 = vmatprep.subr.bf16.mxu0 0
    %298 = vmatpush2.bf16.msra.mxu0 0
    %299 = vmatprep.subr.bf16.mxu0 0
    %300 = vmatpush2.bf16.msra.mxu0 0
    %301 = vmatprep.subr.bf16.mxu0 0
    %302 = vmatpush2.bf16.msra.mxu0 0
    %303 = vmatprep.subr.bf16.mxu0 0
    %304 = vmatpush2.bf16.msra.mxu0 0
    %305 = vmatprep.subr.bf16.mxu0 0
    %306 = vmatpush2.bf16.msra.mxu0 0
    %307 = vmatprep.subr.bf16.mxu0 0
    %308 = vmatpush2.bf16.msra.mxu0 0
    %309 = vmatprep.subr.bf16.mxu0 0
    %310 = vmatpush2.bf16.msra.mxu0 0
    %311 = vmatprep.mubr.bf16.mxu0 0
    %312 = vmatmul.mubr.bf16.gmra.mxu0 %v274
    %v313 = vpop.f32.mrf.mxu0
    %v314 = vadd.f32 %v268, %v313
    %v315 = vpop.f32.mrf.mxu0
    %v316 = vpop.f32.mrf.mxu0
    %v317 = vpop.f32.mrf.mxu0
    %318 = vdwg.mxu0
    %s319 = scalar_lea.vmem %s3, 8
    %v320 = vld [vmem:[%s319] sm:$0xf]
    %v322 = vsel %vm225, %v320, 0
    %v325 = vsel %vm229, %v207, 0
    %327 = vmatprep.subr.bf16.mxu0 0
    %328 = vmatpush1.bf16.msra.mxu0 0
    %329 = vmatprep.subr.bf16.mxu0 0
    %330 = vmatpush1.bf16.msra.mxu0 0
    %331 = vmatprep.subr.bf16.mxu0 0
    %332 = vmatpush1.bf16.msra.mxu0 0
    %333 = vmatprep.subr.bf16.mxu0 0
    %334 = vmatpush1.bf16.msra.mxu0 0
    %335 = vmatprep.subr.bf16.mxu0 0
    %336 = vmatpush1.bf16.msra.mxu0 0
    %337 = vmatprep.subr.bf16.mxu0 0
    %338 = vmatpush1.bf16.msra.mxu0 0
    %339 = vmatprep.subr.bf16.mxu0 0
    %340 = vmatpush1.bf16.msra.mxu0 0
    %341 = vmatprep.subr.bf16.mxu0 0
    %342 = vmatpush1.bf16.msra.mxu0 %v325
    %343 = vmatprep.subr.bf16.mxu0 0
    %344 = vmatpush2.bf16.msra.mxu0 0
    %345 = vmatprep.subr.bf16.mxu0 0
    %346 = vmatpush2.bf16.msra.mxu0 0
    %347 = vmatprep.subr.bf16.mxu0 0
    %348 = vmatpush2.bf16.msra.mxu0 0
    %349 = vmatprep.subr.bf16.mxu0 0
    %350 = vmatpush2.bf16.msra.mxu0 0
    %351 = vmatprep.subr.bf16.mxu0 0
    %352 = vmatpush2.bf16.msra.mxu0 0
    %353 = vmatprep.subr.bf16.mxu0 0
    %354 = vmatpush2.bf16.msra.mxu0 0
    %355 = vmatprep.subr.bf16.mxu0 0
    %356 = vmatpush2.bf16.msra.mxu0 0
    %357 = vmatprep.subr.bf16.mxu0 0
    %358 = vmatpush2.bf16.msra.mxu0 0
    %359 = vmatprep.mubr.bf16.mxu0 0
    %360 = vmatmul.mubr.bf16.gmra.mxu0 %v322
    %v361 = vpop.f32.mrf.mxu0
    %v362 = vadd.f32 0.0, %v361
    %v363 = vpop.f32.mrf.mxu0
    %v364 = vpop.f32.mrf.mxu0
    %v365 = vpop.f32.mrf.mxu0
    %366 = vdwg.mxu0
    %v367 = vadd.f32 %v314, %v362
    %v368 = vld [vmem:[%s4] sm:$0xff]
    %370 = vset.pattern.permute.xlu0 0
    %371 = vperm.xlu0 %370, %v368
    %v372 = vpop.permute.xlu0 %371
    %v374 = vadd.f32 %v367, %v372
    %v375 = vmax.f32 %v374, 0.0
    %v376 = vld [vmem:[%s0] sm:$0x3]
    %v377 = vld [vmem:[%s5] sm:$0xf]
    %v378 = vld [vmem:[%s6] sm:$0xff]
    %380 = vset.pattern.permute.xlu0 0
    %381 = vperm.xlu0 %380, %v378
    %v382 = vpop.permute.xlu0 %381
    %v386 = vunpack.c.l.s4 1983009808
    %v387 = vunpack.c.0.s8 %v386
    %v388 = vlaneseq
    %v389 = vshrl.u32 %v388, 7
    %v390 = vsub.s32 %v387, %v389
    %v391 = vrot.slane %v376, %v390
    %392 = vrot.lane.b32.xlu0 %v391, 124
    %v393 = vpop.permute.xlu0 %392
    %v395 = vsel %vm45, %v377, 0
    %v398 = vsel %vm49, %v393, 0
    %400 = vmatprep.subr.bf16.mxu0 0
    %401 = vmatpush1.bf16.msra.mxu0 0
    %402 = vmatprep.subr.bf16.mxu0 0
    %403 = vmatpush1.bf16.msra.mxu0 0
    %404 = vmatprep.subr.bf16.mxu0 0
    %405 = vmatpush1.bf16.msra.mxu0 0
    %406 = vmatprep.subr.bf16.mxu0 0
    %407 = vmatpush1.bf16.msra.mxu0 0
    %408 = vmatprep.subr.bf16.mxu0 0
    %409 = vmatpush1.bf16.msra.mxu0 0
    %410 = vmatprep.subr.bf16.mxu0 0
    %411 = vmatpush1.bf16.msra.mxu0 0
    %412 = vmatprep.subr.bf16.mxu0 0
    %413 = vmatpush1.bf16.msra.mxu0 0
    %414 = vmatprep.subr.bf16.mxu0 0
    %415 = vmatpush1.bf16.msra.mxu0 %v398
    %416 = vmatprep.subr.bf16.mxu0 0
    %417 = vmatpush2.bf16.msra.mxu0 0
    %418 = vmatprep.subr.bf16.mxu0 0
    %419 = vmatpush2.bf16.msra.mxu0 0
    %420 = vmatprep.subr.bf16.mxu0 0
    %421 = vmatpush2.bf16.msra.mxu0 0
    %422 = vmatprep.subr.bf16.mxu0 0
    %423 = vmatpush2.bf16.msra.mxu0 0
    %424 = vmatprep.subr.bf16.mxu0 0
    %425 = vmatpush2.bf16.msra.mxu0 0
    %426 = vmatprep.subr.bf16.mxu0 0
    %427 = vmatpush2.bf16.msra.mxu0 0
    %428 = vmatprep.subr.bf16.mxu0 0
    %429 = vmatpush2.bf16.msra.mxu0 0
    %430 = vmatprep.subr.bf16.mxu0 0
    %431 = vmatpush2.bf16.msra.mxu0 0
    %432 = vmatprep.mubr.bf16.mxu0 0
    %433 = vmatmul.mubr.bf16.gmra.mxu0 %v395
    %v434 = vpop.f32.mrf.mxu0
    %v435 = vadd.f32 %v382, %v434
    %v436 = vpop.f32.mrf.mxu0
    %v437 = vpop.f32.mrf.mxu0
    %v438 = vpop.f32.mrf.mxu0
    %439 = vdwg.mxu0
    %v440 = vadd.f32 %v375, %v435
    %v441 = vmax.f32 %v440, 0.0
    %vm442 = vcmask 130048
    %443 = vst.msk [vmem:[#allocation3] sm:$0xff] %vm442, %v441
    %s444 = scalar_lea.vmem %s0, 2
    %v445 = vld [vmem:[%s444] sm:$0x3]
    %v446 = vld [vmem:[%s1] sm:$0xf]
    %v447 = vld [vmem:[%s33] sm:$0xf]
    %v450 = vunpack.c.l.s4 1983009808
    %v451 = vunpack.c.0.s8 %v450
    %v452 = vlaneseq
    %v453 = vshrl.u32 %v452, 7
    %v454 = vsub.s32 %v451, %v453
    %v455 = vrot.slane %v445, %v454
    %456 = vrot.lane.b32.xlu0 %v455, 126
    %v457 = vpop.permute.xlu0 %456
    %v459 = vsel %vm45, %v447, 0
    %v462 = vsel %vm49, %v457, 0
    %464 = vmatprep.subr.bf16.mxu0 0
    %465 = vmatpush1.bf16.msra.mxu0 0
    %466 = vmatprep.subr.bf16.mxu0 0
    %467 = vmatpush1.bf16.msra.mxu0 0
    %468 = vmatprep.subr.bf16.mxu0 0
    %469 = vmatpush1.bf16.msra.mxu0 0
    %470 = vmatprep.subr.bf16.mxu0 0
    %471 = vmatpush1.bf16.msra.mxu0 0
    %472 = vmatprep.subr.bf16.mxu0 0
    %473 = vmatpush1.bf16.msra.mxu0 0
    %474 = vmatprep.subr.bf16.mxu0 0
    %475 = vmatpush1.bf16.msra.mxu0 0
    %476 = vmatprep.subr.bf16.mxu0 0
    %477 = vmatpush1.bf16.msra.mxu0 0
    %478 = vmatprep.subr.bf16.mxu0 0
    %479 = vmatpush1.bf16.msra.mxu0 %v462
    %480 = vmatprep.subr.bf16.mxu0 0
    %481 = vmatpush2.bf16.msra.mxu0 0
    %482 = vmatprep.subr.bf16.mxu0 0
    %483 = vmatpush2.bf16.msra.mxu0 0
    %484 = vmatprep.subr.bf16.mxu0 0
    %485 = vmatpush2.bf16.msra.mxu0 0
    %486 = vmatprep.subr.bf16.mxu0 0
    %487 = vmatpush2.bf16.msra.mxu0 0
    %488 = vmatprep.subr.bf16.mxu0 0
    %489 = vmatpush2.bf16.msra.mxu0 0
    %490 = vmatprep.subr.bf16.mxu0 0
    %491 = vmatpush2.bf16.msra.mxu0 0
    %492 = vmatprep.subr.bf16.mxu0 0
    %493 = vmatpush2.bf16.msra.mxu0 0
    %494 = vmatprep.subr.bf16.mxu0 0
    %495 = vmatpush2.bf16.msra.mxu0 0
    %496 = vmatprep.mubr.bf16.mxu0 0
    %497 = vmatmul.mubr.bf16.gmra.mxu0 %v459
    %v498 = vpop.f32.mrf.mxu0
    %v499 = vadd.f32 0.0, %v498
    %v500 = vpop.f32.mrf.mxu0
    %v501 = vpop.f32.mrf.mxu0
    %v502 = vpop.f32.mrf.mxu0
    %503 = vdwg.mxu0
    %v505 = vsel %vm45, %v446, 0
    %v508 = vsel %vm49, %v445, 0
    %510 = vmatprep.subr.bf16.mxu0 0
    %511 = vmatpush1.bf16.msra.mxu0 0
    %512 = vmatprep.subr.bf16.mxu0 0
    %513 = vmatpush1.bf16.msra.mxu0 0
    %514 = vmatprep.subr.bf16.mxu0 0
    %515 = vmatpush1.bf16.msra.mxu0 0
    %516 = vmatprep.subr.bf16.mxu0 0
    %517 = vmatpush1.bf16.msra.mxu0 0
    %518 = vmatprep.subr.bf16.mxu0 0
    %519 = vmatpush1.bf16.msra.mxu0 0
    %520 = vmatprep.subr.bf16.mxu0 0
    %521 = vmatpush1.bf16.msra.mxu0 0
    %522 = vmatprep.subr.bf16.mxu0 0
    %523 = vmatpush1.bf16.msra.mxu0 0
    %524 = vmatprep.subr.bf16.mxu0 0
    %525 = vmatpush1.bf16.msra.mxu0 %v508
    %526 = vmatprep.subr.bf16.mxu0 0
    %527 = vmatpush2.bf16.msra.mxu0 0
    %528 = vmatprep.subr.bf16.mxu0 0
    %529 = vmatpush2.bf16.msra.mxu0 0
    %530 = vmatprep.subr.bf16.mxu0 0
    %531 = vmatpush2.bf16.msra.mxu0 0
    %532 = vmatprep.subr.bf16.mxu0 0
    %533 = vmatpush2.bf16.msra.mxu0 0
    %534 = vmatprep.subr.bf16.mxu0 0
    %535 = vmatpush2.bf16.msra.mxu0 0
    %536 = vmatprep.subr.bf16.mxu0 0
    %537 = vmatpush2.bf16.msra.mxu0 0
    %538 = vmatprep.subr.bf16.mxu0 0
    %539 = vmatpush2.bf16.msra.mxu0 0
    %540 = vmatprep.subr.bf16.mxu0 0
    %541 = vmatpush2.bf16.msra.mxu0 0
    %542 = vmatprep.mubr.bf16.mxu0 0
    %543 = vmatmul.mubr.bf16.gmra.mxu0 %v505
    %v544 = vpop.f32.mrf.mxu0
    %v545 = vadd.f32 %v499, %v544
    %v546 = vpop.f32.mrf.mxu0
    %v547 = vpop.f32.mrf.mxu0
    %v548 = vpop.f32.mrf.mxu0
    %549 = vdwg.mxu0
    %v550 = vld [vmem:[%s444] sm:$0x3]
    %v551 = vld [vmem:[%s140] sm:$0xf]
    %v554 = vunpack.c.l.s4 1983009808
    %v555 = vunpack.c.0.s8 %v554
    %v556 = vlaneseq
    %v557 = vshrl.u32 %v556, 7
    %v558 = vsub.s32 %v555, %v557
    %v559 = vrot.slane %v550, %v558
    %560 = vrot.lane.b32.xlu0 %v559, 124
    %v561 = vpop.permute.xlu0 %560
    %v563 = vsel %vm45, %v551, 0
    %v566 = vsel %vm49, %v561, 0
    %568 = vmatprep.subr.bf16.mxu0 0
    %569 = vmatpush1.bf16.msra.mxu0 0
    %570 = vmatprep.subr.bf16.mxu0 0
    %571 = vmatpush1.bf16.msra.mxu0 0
    %572 = vmatprep.subr.bf16.mxu0 0
    %573 = vmatpush1.bf16.msra.mxu0 0
    %574 = vmatprep.subr.bf16.mxu0 0
    %575 = vmatpush1.bf16.msra.mxu0 0
    %576 = vmatprep.subr.bf16.mxu0 0
    %577 = vmatpush1.bf16.msra.mxu0 0
    %578 = vmatprep.subr.bf16.mxu0 0
    %579 = vmatpush1.bf16.msra.mxu0 0
    %580 = vmatprep.subr.bf16.mxu0 0
    %581 = vmatpush1.bf16.msra.mxu0 0
    %582 = vmatprep.subr.bf16.mxu0 0
    %583 = vmatpush1.bf16.msra.mxu0 %v566
    %584 = vmatprep.subr.bf16.mxu0 0
    %585 = vmatpush2.bf16.msra.mxu0 0
    %586 = vmatprep.subr.bf16.mxu0 0
    %587 = vmatpush2.bf16.msra.mxu0 0
    %588 = vmatprep.subr.bf16.mxu0 0
    %589 = vmatpush2.bf16.msra.mxu0 0
    %590 = vmatprep.subr.bf16.mxu0 0
    %591 = vmatpush2.bf16.msra.mxu0 0
    %592 = vmatprep.subr.bf16.mxu0 0
    %593 = vmatpush2.bf16.msra.mxu0 0
    %594 = vmatprep.subr.bf16.mxu0 0
    %595 = vmatpush2.bf16.msra.mxu0 0
    %596 = vmatprep.subr.bf16.mxu0 0
    %597 = vmatpush2.bf16.msra.mxu0 0
    %598 = vmatprep.subr.bf16.mxu0 0
    %599 = vmatpush2.bf16.msra.mxu0 0
    %600 = vmatprep.mubr.bf16.mxu0 0
    %601 = vmatmul.mubr.bf16.gmra.mxu0 %v563
    %v602 = vpop.f32.mrf.mxu0
    %v603 = vadd.f32 0.0, %v602
    %v604 = vpop.f32.mrf.mxu0
    %v605 = vpop.f32.mrf.mxu0
    %v606 = vpop.f32.mrf.mxu0
    %607 = vdwg.mxu0
    %v608 = vadd.f32 %v545, %v603
    %v609 = vld [vmem:[%s2] sm:$0xff]
    %611 = vset.pattern.permute.xlu0 0
    %612 = vperm.xlu0 %611, %v609
    %v613 = vpop.permute.xlu0 %612
    %v615 = vadd.f32 %v608, %v613
    %v616 = vmax.f32 %v615, 0.0
    %v617 = vpack.c.bf16 %v616, %v616
    %v619 = vunpack.c.l.b16 %v617
    %v620 = vpack.c.b16 %v619, %v619
    %621 = vrot.lane.b32.xlu0 %v620, 4
    %v622 = vpop.permute.xlu0 %621
    %s624 = scalar_lea.vmem [#allocation2], 4
    %625 = vst.msk [vmem:[%s624] sm:$0xf] %vm214, %v622
    %v626 = vld [vmem:[%s624] sm:$0xf]
    %v627 = vld [vmem:[%s3] sm:$0xf]
    %v628 = vld [vmem:[%s218] sm:$0xf]
    %v630 = vunpack.c.l.b16 %v626
    %v631 = vpack.c.b16 %v630, %v630
    %632 = vrot.lane.b32.xlu0 %v631, 126
    %v633 = vpop.permute.xlu0 %632
    %v635 = vsel %vm225, %v628, 0
    %v638 = vsel %vm229, %v633, 0
    %640 = vmatprep.subr.bf16.mxu0 0
    %641 = vmatpush1.bf16.msra.mxu0 0
    %642 = vmatprep.subr.bf16.mxu0 0
    %643 = vmatpush1.bf16.msra.mxu0 0
    %644 = vmatprep.subr.bf16.mxu0 0
    %645 = vmatpush1.bf16.msra.mxu0 0
    %646 = vmatprep.subr.bf16.mxu0 0
    %647 = vmatpush1.bf16.msra.mxu0 0
    %648 = vmatprep.subr.bf16.mxu0 0
    %649 = vmatpush1.bf16.msra.mxu0 0
    %650 = vmatprep.subr.bf16.mxu0 0
    %651 = vmatpush1.bf16.msra.mxu0 0
    %652 = vmatprep.subr.bf16.mxu0 0
    %653 = vmatpush1.bf16.msra.mxu0 0
    %654 = vmatprep.subr.bf16.mxu0 0
    %655 = vmatpush1.bf16.msra.mxu0 %v638
    %656 = vmatprep.subr.bf16.mxu0 0
    %657 = vmatpush2.bf16.msra.mxu0 0
    %658 = vmatprep.subr.bf16.mxu0 0
    %659 = vmatpush2.bf16.msra.mxu0 0
    %660 = vmatprep.subr.bf16.mxu0 0
    %661 = vmatpush2.bf16.msra.mxu0 0
    %662 = vmatprep.subr.bf16.mxu0 0
    %663 = vmatpush2.bf16.msra.mxu0 0
    %664 = vmatprep.subr.bf16.mxu0 0
    %665 = vmatpush2.bf16.msra.mxu0 0
    %666 = vmatprep.subr.bf16.mxu0 0
    %667 = vmatpush2.bf16.msra.mxu0 0
    %668 = vmatprep.subr.bf16.mxu0 0
    %669 = vmatpush2.bf16.msra.mxu0 0
    %670 = vmatprep.subr.bf16.mxu0 0
    %671 = vmatpush2.bf16.msra.mxu0 0
    %672 = vmatprep.mubr.bf16.mxu0 0
    %673 = vmatmul.mubr.bf16.gmra.mxu0 %v635
    %v674 = vpop.f32.mrf.mxu0
    %v675 = vadd.f32 0.0, %v674
    %v676 = vpop.f32.mrf.mxu0
    %v677 = vpop.f32.mrf.mxu0
    %v678 = vpop.f32.mrf.mxu0
    %679 = vdwg.mxu0
    %v681 = vsel %vm225, %v627, 0
    %v684 = vsel %vm229, %v626, 0
    %686 = vmatprep.subr.bf16.mxu0 0
    %687 = vmatpush1.bf16.msra.mxu0 0
    %688 = vmatprep.subr.bf16.mxu0 0
    %689 = vmatpush1.bf16.msra.mxu0 0
    %690 = vmatprep.subr.bf16.mxu0 0
    %691 = vmatpush1.bf16.msra.mxu0 0
    %692 = vmatprep.subr.bf16.mxu0 0
    %693 = vmatpush1.bf16.msra.mxu0 0
    %694 = vmatprep.subr.bf16.mxu0 0
    %695 = vmatpush1.bf16.msra.mxu0 0
    %696 = vmatprep.subr.bf16.mxu0 0
    %697 = vmatpush1.bf16.msra.mxu0 0
    %698 = vmatprep.subr.bf16.mxu0 0
    %699 = vmatpush1.bf16.msra.mxu0 0
    %700 = vmatprep.subr.bf16.mxu0 0
    %701 = vmatpush1.bf16.msra.mxu0 %v684
    %702 = vmatprep.subr.bf16.mxu0 0
    %703 = vmatpush2.bf16.msra.mxu0 0
    %704 = vmatprep.subr.bf16.mxu0 0
    %705 = vmatpush2.bf16.msra.mxu0 0
    %706 = vmatprep.subr.bf16.mxu0 0
    %707 = vmatpush2.bf16.msra.mxu0 0
    %708 = vmatprep.subr.bf16.mxu0 0
    %709 = vmatpush2.bf16.msra.mxu0 0
    %710 = vmatprep.subr.bf16.mxu0 0
    %711 = vmatpush2.bf16.msra.mxu0 0
    %712 = vmatprep.subr.bf16.mxu0 0
    %713 = vmatpush2.bf16.msra.mxu0 0
    %714 = vmatprep.subr.bf16.mxu0 0
    %715 = vmatpush2.bf16.msra.mxu0 0
    %716 = vmatprep.subr.bf16.mxu0 0
    %717 = vmatpush2.bf16.msra.mxu0 0
    %718 = vmatprep.mubr.bf16.mxu0 0
    %719 = vmatmul.mubr.bf16.gmra.mxu0 %v681
    %v720 = vpop.f32.mrf.mxu0
    %v721 = vadd.f32 %v675, %v720
    %v722 = vpop.f32.mrf.mxu0
    %v723 = vpop.f32.mrf.mxu0
    %v724 = vpop.f32.mrf.mxu0
    %725 = vdwg.mxu0
    %v726 = vld [vmem:[%s319] sm:$0xf]
    %v728 = vsel %vm225, %v726, 0
    %v731 = vsel %vm229, %v617, 0
    %733 = vmatprep.subr.bf16.mxu0 0
    %734 = vmatpush1.bf16.msra.mxu0 0
    %735 = vmatprep.subr.bf16.mxu0 0
    %736 = vmatpush1.bf16.msra.mxu0 0
    %737 = vmatprep.subr.bf16.mxu0 0
    %738 = vmatpush1.bf16.msra.mxu0 0
    %739 = vmatprep.subr.bf16.mxu0 0
    %740 = vmatpush1.bf16.msra.mxu0 0
    %741 = vmatprep.subr.bf16.mxu0 0
    %742 = vmatpush1.bf16.msra.mxu0 0
    %743 = vmatprep.subr.bf16.mxu0 0
    %744 = vmatpush1.bf16.msra.mxu0 0
    %745 = vmatprep.subr.bf16.mxu0 0
    %746 = vmatpush1.bf16.msra.mxu0 0
    %747 = vmatprep.subr.bf16.mxu0 0
    %748 = vmatpush1.bf16.msra.mxu0 %v731
    %749 = vmatprep.subr.bf16.mxu0 0
    %750 = vmatpush2.bf16.msra.mxu0 0
    %751 = vmatprep.subr.bf16.mxu0 0
    %752 = vmatpush2.bf16.msra.mxu0 0
    %753 = vmatprep.subr.bf16.mxu0 0
    %754 = vmatpush2.bf16.msra.mxu0 0
    %755 = vmatprep.subr.bf16.mxu0 0
    %756 = vmatpush2.bf16.msra.mxu0 0
    %757 = vmatprep.subr.bf16.mxu0 0
    %758 = vmatpush2.bf16.msra.mxu0 0
    %759 = vmatprep.subr.bf16.mxu0 0
    %760 = vmatpush2.bf16.msra.mxu0 0
    %761 = vmatprep.subr.bf16.mxu0 0
    %762 = vmatpush2.bf16.msra.mxu0 0
    %763 = vmatprep.subr.bf16.mxu0 0
    %764 = vmatpush2.bf16.msra.mxu0 0
    %765 = vmatprep.mubr.bf16.mxu0 0
    %766 = vmatmul.mubr.bf16.gmra.mxu0 %v728
    %v767 = vpop.f32.mrf.mxu0
    %v768 = vadd.f32 0.0, %v767
    %v769 = vpop.f32.mrf.mxu0
    %v770 = vpop.f32.mrf.mxu0
    %v771 = vpop.f32.mrf.mxu0
    %772 = vdwg.mxu0
    %v773 = vadd.f32 %v721, %v768
    %v774 = vld [vmem:[%s4] sm:$0xff]
    %776 = vset.pattern.permute.xlu0 0
    %777 = vperm.xlu0 %776, %v774
    %v778 = vpop.permute.xlu0 %777
    %v780 = vadd.f32 %v773, %v778
    %v781 = vmax.f32 %v780, 0.0
    %v782 = vld [vmem:[%s444] sm:$0x3]
    %v783 = vld [vmem:[%s5] sm:$0xf]
    %v784 = vld [vmem:[%s6] sm:$0xff]
    %786 = vset.pattern.permute.xlu0 0
    %787 = vperm.xlu0 %786, %v784
    %v788 = vpop.permute.xlu0 %787
    %v792 = vunpack.c.l.s4 1983009808
    %v793 = vunpack.c.0.s8 %v792
    %v794 = vlaneseq
    %v795 = vshrl.u32 %v794, 7
    %v796 = vsub.s32 %v793, %v795
    %v797 = vrot.slane %v782, %v796
    %798 = vrot.lane.b32.xlu0 %v797, 124
    %v799 = vpop.permute.xlu0 %798
    %v801 = vsel %vm45, %v783, 0
    %v804 = vsel %vm49, %v799, 0
    %806 = vmatprep.subr.bf16.mxu0 0
    %807 = vmatpush1.bf16.msra.mxu0 0
    %808 = vmatprep.subr.bf16.mxu0 0
    %809 = vmatpush1.bf16.msra.mxu0 0
    %810 = vmatprep.subr.bf16.mxu0 0
    %811 = vmatpush1.bf16.msra.mxu0 0
    %812 = vmatprep.subr.bf16.mxu0 0
    %813 = vmatpush1.bf16.msra.mxu0 0
    %814 = vmatprep.subr.bf16.mxu0 0
    %815 = vmatpush1.bf16.msra.mxu0 0
    %816 = vmatprep.subr.bf16.mxu0 0
    %817 = vmatpush1.bf16.msra.mxu0 0
    %818 = vmatprep.subr.bf16.mxu0 0
    %819 = vmatpush1.bf16.msra.mxu0 0
    %820 = vmatprep.subr.bf16.mxu0 0
    %821 = vmatpush1.bf16.msra.mxu0 %v804
    %822 = vmatprep.subr.bf16.mxu0 0
    %823 = vmatpush2.bf16.msra.mxu0 0
    %824 = vmatprep.subr.bf16.mxu0 0
    %825 = vmatpush2.bf16.msra.mxu0 0
    %826 = vmatprep.subr.bf16.mxu0 0
    %827 = vmatpush2.bf16.msra.mxu0 0
    %828 = vmatprep.subr.bf16.mxu0 0
    %829 = vmatpush2.bf16.msra.mxu0 0
    %830 = vmatprep.subr.bf16.mxu0 0
    %831 = vmatpush2.bf16.msra.mxu0 0
    %832 = vmatprep.subr.bf16.mxu0 0
    %833 = vmatpush2.bf16.msra.mxu0 0
    %834 = vmatprep.subr.bf16.mxu0 0
    %835 = vmatpush2.bf16.msra.mxu0 0
    %836 = vmatprep.subr.bf16.mxu0 0
    %837 = vmatpush2.bf16.msra.mxu0 0
    %838 = vmatprep.mubr.bf16.mxu0 0
    %839 = vmatmul.mubr.bf16.gmra.mxu0 %v801
    %v840 = vpop.f32.mrf.mxu0
    %v841 = vadd.f32 %v788, %v840
    %v842 = vpop.f32.mrf.mxu0
    %v843 = vpop.f32.mrf.mxu0
    %v844 = vpop.f32.mrf.mxu0
    %845 = vdwg.mxu0
    %v846 = vadd.f32 %v781, %v841
    %v847 = vmax.f32 %v846, 0.0
    %s848 = scalar_lea.vmem [#allocation3], 8
    %849 = vst.msk [vmem:[%s848] sm:$0xff] %vm442, %v847
    // Predicated region
    $region30: #{tpu_custom_call.1} parent=1 // pred_check
      _
    $region31: #{tpu_custom_call.1} parent=1 // pred_check_branch
      %851 = sbr.rel (0) target = $region33
    $region32: #{tpu_custom_call.1} parent=1 // pred_region
      %s853 = ssub.s32 256, 256
      %854 = vsyncadd [#allocation4], %s853
      %s855 = sshll.u32 [#allocation3], 4
      %s856 = int_to_ptr.vmem [resolvable:$true] %s855
      %861 = dma.vmem_to_hbm [thread:$0]  %s856, 256, %s7, [#allocation4], 128, 128, 8
    $region33: #{tpu_custom_call.1} parent=1 // pred_fallthru
      _
    // Predicated region
    $region34: #{tpu_custom_call.1} parent=1 // pred_check
      _
    $region35: #{tpu_custom_call.1} parent=1 // pred_check_branch
      %863 = sbr.rel (0) target = $region37
    $region36: #{tpu_custom_call.1} parent=1 // pred_region
      %864 = dma.done [#allocation4], 256
    $region37: #{tpu_custom_call.1} parent=1 // pred_fallthru
      _
    %865 = vsyncpa [#allocation4], 1

</llo_original>
